<compile_context>
chip_gen: v5e
topology: v5e:2x2
jax: 0.10.0
libtpu: 0.0.40
codegen_flags: <defaults>
</compile_context>

<pallas_src>
import jax
import jax.numpy as jnp
from jax import lax
from jax.experimental import pallas as pl
from jax.experimental.pallas import tpu as pltpu

HIDDEN_SIZE = 32
INPUT_SIZE = 3
NUM_LAYERS = 2
OUTPUT_SIZE = 1


def _lstm_kernel(x_ref,      # ((T+1)*B, I)  t-major input, phantom zero last step
                 wih0p_ref,  # (I, 8H)  layer-0 W_ih^T scattered into packed cols
                 bpack_ref,  # (1, 8H)  b_ih+b_hh of both layers, packed cols
                 wrec_ref,   # (2H, 8H) fused [Whh0^T|Wih1^T ; 0|Whh1^T], packed
                 wfc_ref,    # (H, O)
                 bfc_ref,    # (1, O)
                 out_ref):   # (B, O)
    H8 = wrec_ref.shape[1]          # 8H = packed gate width for both layers
    H = H8 // 8
    B = out_ref.shape[0]
    TT = x_ref.shape[0] // B        # T + 1 (includes the phantom epilogue step)

    wrec = wrec_ref[...]

    # Input projection + biases for ALL timesteps in one MXU call (off the
    # recurrent critical path).  Row-slab s holds (packed columns):
    #   layer-0 slots: x(s) @ Wih0^T + b0   ;   layer-1 slots: b1
    gadd = (jnp.dot(x_ref[...], wih0p_ref[...],
                    preferred_element_type=jnp.float32)
            + bpack_ref[...])                                   # ((T+1)*B, 8H)

    # Hoisted activation constants.  Packed gate columns: [i0 i1 f0 f1 g0 g1 o0 o1].
    # sigmoid(x) = 0.5*(1 + tanh(x/2))  ->  a single tanh covers all gates.
    lane = lax.broadcasted_iota(jnp.int32, (B, H8), 1)
    g_mask = (lane >= 4 * H) & (lane < 6 * H)                   # the g0|g1 block
    scale = jnp.where(g_mask, 1.0, 0.5).astype(jnp.float32)     # pre & post scale
    shift = jnp.where(g_mask, 0.0, 0.5).astype(jnp.float32)

    # Mask selecting the layer-0 half of the packed state (prologue only).
    lane2 = lax.broadcasted_iota(jnp.int32, (B, 2 * H), 1)
    l0_mask = (lane2 < H).astype(jnp.float32)

    def cell(gates, c_prev):
        # gates: (B, 8H) packed pre-activations; c_prev: (B, 2H) packed cells.
        t = jnp.tanh(gates * scale)            # single EUP pass for both layers
        act = t * scale + shift                # g lanes: tanh(x); others: sigmoid(x)
        i = act[:, 0 * H:2 * H]                # 64-lane, half-vreg-aligned slices
        f = act[:, 2 * H:4 * H]
        g = act[:, 4 * H:6 * H]
        o = act[:, 6 * H:8 * H]
        c_new = f * c_prev + i * g             # one (B,2H) update, both layers
        h_new = o * jnp.tanh(c_new)
        return h_new, c_new

    # ---- prologue: layer-0 at t=0 (h0(-1)=0 -> no recurrent matmul needed) ----
    czero = jnp.zeros((B, 2 * H), jnp.float32)
    hc, cc = cell(gadd[0:B, :], czero)
    hc = hc * l0_mask                          # keep layer-1 state exactly zero
    cc = cc * l0_mask

    # ---- staggered steady state (statically unrolled; state stays in vregs) ----
    # Step s: layer-0 at t=s and layer-1 at t=s-1 from ONE fused matmul.
    # Final phantom step s=T: layer-0 half is discarded, layer-1 half is t=T-1.
    for s in range(1, TT):
        rec = jnp.dot(hc, wrec, preferred_element_type=jnp.float32)   # (B, 8H)
        hc, cc = cell(rec + gadd[s * B:(s + 1) * B, :], cc)

    # fc head on the last timestep's layer-1 hidden state (= layer-1 half of hc).
    h1 = hc[:, H:2 * H]
    out_ref[...] = (jnp.dot(h1, wfc_ref[...],
                            preferred_element_type=jnp.float32)
                    + bfc_ref[...])


def _pack_cols(w4h, layer):
    """Scatter (K, 4H) gate-major columns [i f g o] into the packed (K, 8H)
    layout [i0 i1 f0 f1 g0 g1 o0 o1], filling the given layer's slots."""
    K = w4h.shape[0]
    H = w4h.shape[1] // 4
    out = jnp.zeros((K, 8 * H), w4h.dtype)
    for gi in range(4):
        col = (2 * gi + layer) * H
        out = out.at[:, col:col + H].set(w4h[:, gi * H:(gi + 1) * H])
    return out


@jax.jit
def lstm_forward(x, params):
    """x: (B, T, I) float32 — same layout as PyTorch batch_first input."""
    B, T, I = x.shape
    H = HIDDEN_SIZE
    O = OUTPUT_SIZE

    # (B,T,I) -> (T,B,I); append a zero phantom timestep whose projected gates are
    # exactly the biases — it drives the layer-1 epilogue (t=T-1) in the kernel.
    x_tm = jnp.transpose(x, (1, 0, 2)).astype(jnp.float32)
    x_tm = jnp.concatenate([x_tm, jnp.zeros((1, B, I), jnp.float32)], axis=0)
    x_flat = x_tm.reshape((T + 1) * B, I)

    # Packed parameter slabs (see kernel header for the column layout).
    b0 = (params['b_ih_l0'] + params['b_hh_l0'])[None, :]          # (1, 4H)
    b1 = (params['b_ih_l1'] + params['b_hh_l1'])[None, :]          # (1, 4H)
    wih0p = _pack_cols(params['w_ih_l0'].T, layer=0)               # (I, 8H)
    bpack = _pack_cols(b0, 0) + _pack_cols(b1, 1)                  # (1, 8H)
    wrec = jnp.concatenate(
        [_pack_cols(params['w_hh_l0'].T, 0) + _pack_cols(params['w_ih_l1'].T, 1),
         _pack_cols(params['w_hh_l1'].T, 1)],
        axis=0)                                                    # (2H, 8H)
    wfc = params['w_fc'].T                                         # (H, O)
    bfc = params['b_fc'][None, :]                                  # (1, O)

    assert B % 8 == 0, "batch must be sublane-aligned (multiple of 8)"
    assert (T + 1) * B * 8 * H * 4 < 8 * 1024 * 1024, \
        "sequence too long for whole-sequence VMEM residency; add a T grid"
    # Larger real workloads: stack more sequences so the per-step matmul LHS has
    # 128-256 rows, and add a batch grid axis with dimension_semantics=("parallel",)
    # to engage both v7x TensorCores.  At B=8 the grid would be degenerate.

    vmem = pl.BlockSpec(memory_space=pltpu.MemorySpace.VMEM)

    flops = (2 * (T + 1) * B * I * 8 * H       # packed input projection
             + 2 * T * B * (2 * H) * (8 * H)   # fused staggered recurrent matmuls
             + 2 * B * H * O)                  # fc head
    transcendentals = (T + 1) * B * (8 * H + 2 * H)   # gate tanh + cell tanh
    bytes_accessed = 4 * (x_flat.size + wih0p.size + bpack.size + wrec.size
                          + wfc.size + bfc.size + B * O)

    out = pl.pallas_call(
        _lstm_kernel,
        out_shape=jax.ShapeDtypeStruct((B, O), jnp.float32),
        in_specs=[vmem] * 6,
        out_specs=vmem,
        cost_estimate=pl.CostEstimate(
            flops=int(flops),
            transcendentals=int(transcendentals),
            bytes_accessed=int(bytes_accessed)),
    )(x_flat, wih0p, bpack, wrec, wfc, bfc)
    return out


def init_params(key):
    """Deterministic init mimicking PyTorch's U(-1/sqrt(H), 1/sqrt(H))."""
    H, I, O = HIDDEN_SIZE, INPUT_SIZE, OUTPUT_SIZE
    bound = 1.0 / (H ** 0.5)
    names_shapes = [
        ('w_ih_l0', (4 * H, I)), ('w_hh_l0', (4 * H, H)),
        ('b_ih_l0', (4 * H,)),   ('b_hh_l0', (4 * H,)),
        ('w_ih_l1', (4 * H, H)), ('w_hh_l1', (4 * H, H)),
        ('b_ih_l1', (4 * H,)),   ('b_hh_l1', (4 * H,)),
        ('w_fc', (O, H)),        ('b_fc', (O,)),
    ]
    keys = jax.random.split(key, len(names_shapes))
    return {name: jax.random.uniform(k, shape, jnp.float32, -bound, bound)
            for k, (name, shape) in zip(keys, names_shapes)}


def lstm_forward_ref(x, params):
    """Pure-JAX reference for correctness checking (mirrors PyTorch exactly)."""
    B, T, I = x.shape
    H = HIDDEN_SIZE

    def cell(x_t, h, c, w_ih, w_hh, b_ih, b_hh):
        gates = x_t @ w_ih.T + b_ih + h @ w_hh.T + b_hh
        i = jax.nn.sigmoid(gates[:, 0 * H:1 * H])
        f = jax.nn.sigmoid(gates[:, 1 * H:2 * H])
        g = jnp.tanh(gates[:, 2 * H:3 * H])
        o = jax.nn.sigmoid(gates[:, 3 * H:4 * H])
        c = f * c + i * g
        h = o * jnp.tanh(c)
        return h, c

    h0 = jnp.zeros((B, H)); c0 = jnp.zeros((B, H))
    h1 = jnp.zeros((B, H)); c1 = jnp.zeros((B, H))
    for t in range(T):
        h0, c0 = cell(x[:, t, :], h0, c0,
                      params['w_ih_l0'], params['w_hh_l0'],
                      params['b_ih_l0'], params['b_hh_l0'])
        h1, c1 = cell(h0, h1, c1,
                      params['w_ih_l1'], params['w_hh_l1'],
                      params['b_ih_l1'], params['b_hh_l1'])
    return h1 @ params['w_fc'].T + params['b_fc']


if __name__ == "__main__":
    key = jax.random.PRNGKey(0)
    k_param, k_x = jax.random.split(key)

    B, T = 8, 8  # batch=8 (sublane-aligned), seq=8
    params = init_params(k_param)
    x = jax.random.normal(k_x, (B, T, INPUT_SIZE), jnp.float32)

    out = lstm_forward(x, params)
    out = jax.block_until_ready(out)

    ref = lstm_forward_ref(x, params)
    assert out.shape == (B, OUTPUT_SIZE)
    assert jnp.allclose(out, ref, atol=1e-4, rtol=1e-4), (out, ref)

    print("KERNEL_OK")
</pallas_src>

<mosaic_0001>
module attributes {stable_mosaic.version = 11 : i64} {
  func.func @_lstm_kernel(%arg0: memref<72x3xf32, #tpu.memory_space<vmem>>, %arg1: memref<3x256xf32, #tpu.memory_space<vmem>>, %arg2: memref<1x256xf32, #tpu.memory_space<vmem>>, %arg3: memref<64x256xf32, #tpu.memory_space<vmem>>, %arg4: memref<32x1xf32, #tpu.memory_space<vmem>>, %arg5: memref<1x1xf32, #tpu.memory_space<vmem>>, %arg6: memref<8x1xf32, #tpu.memory_space<vmem>>) attributes {dimension_semantics = [], scalar_prefetch = 0 : i64, scratch_operands = 0 : i64, tpu.core_type = #tpu.core_type<tc>} {
    %c0 = arith.constant 0 : index
    %c0_0 = arith.constant 0 : index
    %0 = vector.load %arg3[%c0, %c0_0] : memref<64x256xf32, #tpu.memory_space<vmem>>, vector<64x256xf32>
    %c0_1 = arith.constant 0 : index
    %c0_2 = arith.constant 0 : index
    %1 = vector.load %arg0[%c0_1, %c0_2] : memref<72x3xf32, #tpu.memory_space<vmem>>, vector<72x3xf32>
    %c0_3 = arith.constant 0 : index
    %c0_4 = arith.constant 0 : index
    %2 = vector.load %arg1[%c0_3, %c0_4] : memref<3x256xf32, #tpu.memory_space<vmem>>, vector<3x256xf32>
    %cst = arith.constant dense<0.000000e+00> : vector<72x256xf32>
    %3 = tpu.matmul %1, %2, %cst {dimension_numbers = #tpu.dot_dimension_numbers<[1], [0], [0], [1], [0, 0, 1, 1], [], []>} : vector<72x3xf32>, vector<3x256xf32>, vector<72x256xf32> -> vector<72x256xf32>
    %c0_5 = arith.constant 0 : index
    %c0_6 = arith.constant 0 : index
    %4 = vector.load %arg2[%c0_5, %c0_6] : memref<1x256xf32, #tpu.memory_space<vmem>>, vector<1x256xf32>
    %5 = vector.broadcast %4 : vector<1x256xf32> to vector<72x256xf32>
    %6 = arith.addf %3, %5 : vector<72x256xf32>
    %7 = tpu.iota {dimensions = array<i32: 1>} : vector<8x256xi32>
    %c128_i32 = arith.constant 128 : i32
    %8 = vector.broadcast %c128_i32 : i32 to vector<8x256xi32>
    %9 = arith.cmpi sge, %7, %8 : vector<8x256xi32>
    %c192_i32 = arith.constant 192 : i32
    %10 = vector.broadcast %c192_i32 : i32 to vector<8x256xi32>
    %11 = arith.cmpi slt, %7, %10 : vector<8x256xi32>
    %12 = arith.andi %9, %11 : vector<8x256xi1>
    %cst_7 = arith.constant 1.000000e+00 : f32
    %cst_8 = arith.constant 5.000000e-01 : f32
    %13 = vector.broadcast %cst_7 : f32 to vector<8x256xf32>
    %14 = vector.broadcast %cst_8 : f32 to vector<8x256xf32>
    %15 = arith.select %12, %13, %14 : vector<8x256xi1>, vector<8x256xf32>
    %cst_9 = arith.constant 0.000000e+00 : f32
    %cst_10 = arith.constant 5.000000e-01 : f32
    %16 = vector.broadcast %cst_9 : f32 to vector<8x256xf32>
    %17 = vector.broadcast %cst_10 : f32 to vector<8x256xf32>
    %18 = arith.select %12, %16, %17 : vector<8x256xi1>, vector<8x256xf32>
    %19 = tpu.iota {dimensions = array<i32: 1>} : vector<8x64xi32>
    %c32_i32 = arith.constant 32 : i32
    %20 = vector.broadcast %c32_i32 : i32 to vector<8x64xi32>
    %21 = arith.cmpi slt, %19, %20 : vector<8x64xi32>
    %22 = arith.extui %21 : vector<8x64xi1> to vector<8x64xi32>
    %23 = arith.sitofp %22 : vector<8x64xi32> to vector<8x64xf32>
    %cst_11 = arith.constant 0.000000e+00 : f32
    %24 = vector.broadcast %cst_11 : f32 to vector<8x64xf32>
    %25 = vector.extract_strided_slice %6 {offsets = [0, 0], sizes = [8, 256], strides = [1, 1]} : vector<72x256xf32> to vector<8x256xf32>
    %26 = arith.mulf %25, %15 : vector<8x256xf32>
    %27 = math.tanh %26 : vector<8x256xf32>
    %28 = arith.mulf %27, %15 : vector<8x256xf32>
    %29 = arith.addf %28, %18 : vector<8x256xf32>
    %30 = vector.extract_strided_slice %29 {offsets = [0, 0], sizes = [8, 64], strides = [1, 1]} : vector<8x256xf32> to vector<8x64xf32>
    %31 = vector.extract_strided_slice %29 {offsets = [0, 64], sizes = [8, 64], strides = [1, 1]} : vector<8x256xf32> to vector<8x64xf32>
    %32 = vector.extract_strided_slice %29 {offsets = [0, 128], sizes = [8, 64], strides = [1, 1]} : vector<8x256xf32> to vector<8x64xf32>
    %33 = vector.extract_strided_slice %29 {offsets = [0, 192], sizes = [8, 64], strides = [1, 1]} : vector<8x256xf32> to vector<8x64xf32>
    %34 = arith.mulf %31, %24 : vector<8x64xf32>
    %35 = arith.mulf %30, %32 : vector<8x64xf32>
    %36 = arith.addf %34, %35 : vector<8x64xf32>
    %37 = math.tanh %36 : vector<8x64xf32>
    %38 = arith.mulf %33, %37 : vector<8x64xf32>
    %39 = arith.mulf %38, %23 : vector<8x64xf32>
    %40 = arith.mulf %36, %23 : vector<8x64xf32>
    %cst_12 = arith.constant dense<0.000000e+00> : vector<8x256xf32>
    %41 = tpu.matmul %39, %0, %cst_12 {dimension_numbers = #tpu.dot_dimension_numbers<[1], [0], [0], [1], [0, 0, 1, 1], [], []>} : vector<8x64xf32>, vector<64x256xf32>, vector<8x256xf32> -> vector<8x256xf32>
    %42 = vector.extract_strided_slice %6 {offsets = [8, 0], sizes = [8, 256], strides = [1, 1]} : vector<72x256xf32> to vector<8x256xf32>
    %43 = arith.addf %41, %42 : vector<8x256xf32>
    %44 = arith.mulf %43, %15 : vector<8x256xf32>
    %45 = math.tanh %44 : vector<8x256xf32>
    %46 = arith.mulf %45, %15 : vector<8x256xf32>
    %47 = arith.addf %46, %18 : vector<8x256xf32>
    %48 = vector.extract_strided_slice %47 {offsets = [0, 0], sizes = [8, 64], strides = [1, 1]} : vector<8x256xf32> to vector<8x64xf32>
    %49 = vector.extract_strided_slice %47 {offsets = [0, 64], sizes = [8, 64], strides = [1, 1]} : vector<8x256xf32> to vector<8x64xf32>
    %50 = vector.extract_strided_slice %47 {offsets = [0, 128], sizes = [8, 64], strides = [1, 1]} : vector<8x256xf32> to vector<8x64xf32>
    %51 = vector.extract_strided_slice %47 {offsets = [0, 192], sizes = [8, 64], strides = [1, 1]} : vector<8x256xf32> to vector<8x64xf32>
    %52 = arith.mulf %49, %40 : vector<8x64xf32>
    %53 = arith.mulf %48, %50 : vector<8x64xf32>
    %54 = arith.addf %52, %53 : vector<8x64xf32>
    %55 = math.tanh %54 : vector<8x64xf32>
    %56 = arith.mulf %51, %55 : vector<8x64xf32>
    %cst_13 = arith.constant dense<0.000000e+00> : vector<8x256xf32>
    %57 = tpu.matmul %56, %0, %cst_13 {dimension_numbers = #tpu.dot_dimension_numbers<[1], [0], [0], [1], [0, 0, 1, 1], [], []>} : vector<8x64xf32>, vector<64x256xf32>, vector<8x256xf32> -> vector<8x256xf32>
    %58 = vector.extract_strided_slice %6 {offsets = [16, 0], sizes = [8, 256], strides = [1, 1]} : vector<72x256xf32> to vector<8x256xf32>
    %59 = arith.addf %57, %58 : vector<8x256xf32>
    %60 = arith.mulf %59, %15 : vector<8x256xf32>
    %61 = math.tanh %60 : vector<8x256xf32>
    %62 = arith.mulf %61, %15 : vector<8x256xf32>
    %63 = arith.addf %62, %18 : vector<8x256xf32>
    %64 = vector.extract_strided_slice %63 {offsets = [0, 0], sizes = [8, 64], strides = [1, 1]} : vector<8x256xf32> to vector<8x64xf32>
    %65 = vector.extract_strided_slice %63 {offsets = [0, 64], sizes = [8, 64], strides = [1, 1]} : vector<8x256xf32> to vector<8x64xf32>
    %66 = vector.extract_strided_slice %63 {offsets = [0, 128], sizes = [8, 64], strides = [1, 1]} : vector<8x256xf32> to vector<8x64xf32>
    %67 = vector.extract_strided_slice %63 {offsets = [0, 192], sizes = [8, 64], strides = [1, 1]} : vector<8x256xf32> to vector<8x64xf32>
    %68 = arith.mulf %65, %54 : vector<8x64xf32>
    %69 = arith.mulf %64, %66 : vector<8x64xf32>
    %70 = arith.addf %68, %69 : vector<8x64xf32>
    %71 = math.tanh %70 : vector<8x64xf32>
    %72 = arith.mulf %67, %71 : vector<8x64xf32>
    %cst_14 = arith.constant dense<0.000000e+00> : vector<8x256xf32>
    %73 = tpu.matmul %72, %0, %cst_14 {dimension_numbers = #tpu.dot_dimension_numbers<[1], [0], [0], [1], [0, 0, 1, 1], [], []>} : vector<8x64xf32>, vector<64x256xf32>, vector<8x256xf32> -> vector<8x256xf32>
    %74 = vector.extract_strided_slice %6 {offsets = [24, 0], sizes = [8, 256], strides = [1, 1]} : vector<72x256xf32> to vector<8x256xf32>
    %75 = arith.addf %73, %74 : vector<8x256xf32>
    %76 = arith.mulf %75, %15 : vector<8x256xf32>
    %77 = math.tanh %76 : vector<8x256xf32>
    %78 = arith.mulf %77, %15 : vector<8x256xf32>
    %79 = arith.addf %78, %18 : vector<8x256xf32>
    %80 = vector.extract_strided_slice %79 {offsets = [0, 0], sizes = [8, 64], strides = [1, 1]} : vector<8x256xf32> to vector<8x64xf32>
    %81 = vector.extract_strided_slice %79 {offsets = [0, 64], sizes = [8, 64], strides = [1, 1]} : vector<8x256xf32> to vector<8x64xf32>
    %82 = vector.extract_strided_slice %79 {offsets = [0, 128], sizes = [8, 64], strides = [1, 1]} : vector<8x256xf32> to vector<8x64xf32>
    %83 = vector.extract_strided_slice %79 {offsets = [0, 192], sizes = [8, 64], strides = [1, 1]} : vector<8x256xf32> to vector<8x64xf32>
    %84 = arith.mulf %81, %70 : vector<8x64xf32>
    %85 = arith.mulf %80, %82 : vector<8x64xf32>
    %86 = arith.addf %84, %85 : vector<8x64xf32>
    %87 = math.tanh %86 : vector<8x64xf32>
    %88 = arith.mulf %83, %87 : vector<8x64xf32>
    %cst_15 = arith.constant dense<0.000000e+00> : vector<8x256xf32>
    %89 = tpu.matmul %88, %0, %cst_15 {dimension_numbers = #tpu.dot_dimension_numbers<[1], [0], [0], [1], [0, 0, 1, 1], [], []>} : vector<8x64xf32>, vector<64x256xf32>, vector<8x256xf32> -> vector<8x256xf32>
    %90 = vector.extract_strided_slice %6 {offsets = [32, 0], sizes = [8, 256], strides = [1, 1]} : vector<72x256xf32> to vector<8x256xf32>
    %91 = arith.addf %89, %90 : vector<8x256xf32>
    %92 = arith.mulf %91, %15 : vector<8x256xf32>
    %93 = math.tanh %92 : vector<8x256xf32>
    %94 = arith.mulf %93, %15 : vector<8x256xf32>
    %95 = arith.addf %94, %18 : vector<8x256xf32>
    %96 = vector.extract_strided_slice %95 {offsets = [0, 0], sizes = [8, 64], strides = [1, 1]} : vector<8x256xf32> to vector<8x64xf32>
    %97 = vector.extract_strided_slice %95 {offsets = [0, 64], sizes = [8, 64], strides = [1, 1]} : vector<8x256xf32> to vector<8x64xf32>
    %98 = vector.extract_strided_slice %95 {offsets = [0, 128], sizes = [8, 64], strides = [1, 1]} : vector<8x256xf32> to vector<8x64xf32>
    %99 = vector.extract_strided_slice %95 {offsets = [0, 192], sizes = [8, 64], strides = [1, 1]} : vector<8x256xf32> to vector<8x64xf32>
    %100 = arith.mulf %97, %86 : vector<8x64xf32>
    %101 = arith.mulf %96, %98 : vector<8x64xf32>
    %102 = arith.addf %100, %101 : vector<8x64xf32>
    %103 = math.tanh %102 : vector<8x64xf32>
    %104 = arith.mulf %99, %103 : vector<8x64xf32>
    %cst_16 = arith.constant dense<0.000000e+00> : vector<8x256xf32>
    %105 = tpu.matmul %104, %0, %cst_16 {dimension_numbers = #tpu.dot_dimension_numbers<[1], [0], [0], [1], [0, 0, 1, 1], [], []>} : vector<8x64xf32>, vector<64x256xf32>, vector<8x256xf32> -> vector<8x256xf32>
    %106 = vector.extract_strided_slice %6 {offsets = [40, 0], sizes = [8, 256], strides = [1, 1]} : vector<72x256xf32> to vector<8x256xf32>
    %107 = arith.addf %105, %106 : vector<8x256xf32>
    %108 = arith.mulf %107, %15 : vector<8x256xf32>
    %109 = math.tanh %108 : vector<8x256xf32>
    %110 = arith.mulf %109, %15 : vector<8x256xf32>
    %111 = arith.addf %110, %18 : vector<8x256xf32>
    %112 = vector.extract_strided_slice %111 {offsets = [0, 0], sizes = [8, 64], strides = [1, 1]} : vector<8x256xf32> to vector<8x64xf32>
    %113 = vector.extract_strided_slice %111 {offsets = [0, 64], sizes = [8, 64], strides = [1, 1]} : vector<8x256xf32> to vector<8x64xf32>
    %114 = vector.extract_strided_slice %111 {offsets = [0, 128], sizes = [8, 64], strides = [1, 1]} : vector<8x256xf32> to vector<8x64xf32>
    %115 = vector.extract_strided_slice %111 {offsets = [0, 192], sizes = [8, 64], strides = [1, 1]} : vector<8x256xf32> to vector<8x64xf32>
    %116 = arith.mulf %113, %102 : vector<8x64xf32>
    %117 = arith.mulf %112, %114 : vector<8x64xf32>
    %118 = arith.addf %116, %117 : vector<8x64xf32>
    %119 = math.tanh %118 : vector<8x64xf32>
    %120 = arith.mulf %115, %119 : vector<8x64xf32>
    %cst_17 = arith.constant dense<0.000000e+00> : vector<8x256xf32>
    %121 = tpu.matmul %120, %0, %cst_17 {dimension_numbers = #tpu.dot_dimension_numbers<[1], [0], [0], [1], [0, 0, 1, 1], [], []>} : vector<8x64xf32>, vector<64x256xf32>, vector<8x256xf32> -> vector<8x256xf32>
    %122 = vector.extract_strided_slice %6 {offsets = [48, 0], sizes = [8, 256], strides = [1, 1]} : vector<72x256xf32> to vector<8x256xf32>
    %123 = arith.addf %121, %122 : vector<8x256xf32>
    %124 = arith.mulf %123, %15 : vector<8x256xf32>
    %125 = math.tanh %124 : vector<8x256xf32>
    %126 = arith.mulf %125, %15 : vector<8x256xf32>
    %127 = arith.addf %126, %18 : vector<8x256xf32>
    %128 = vector.extract_strided_slice %127 {offsets = [0, 0], sizes = [8, 64], strides = [1, 1]} : vector<8x256xf32> to vector<8x64xf32>
    %129 = vector.extract_strided_slice %127 {offsets = [0, 64], sizes = [8, 64], strides = [1, 1]} : vector<8x256xf32> to vector<8x64xf32>
    %130 = vector.extract_strided_slice %127 {offsets = [0, 128], sizes = [8, 64], strides = [1, 1]} : vector<8x256xf32> to vector<8x64xf32>
    %131 = vector.extract_strided_slice %127 {offsets = [0, 192], sizes = [8, 64], strides = [1, 1]} : vector<8x256xf32> to vector<8x64xf32>
    %132 = arith.mulf %129, %118 : vector<8x64xf32>
    %133 = arith.mulf %128, %130 : vector<8x64xf32>
    %134 = arith.addf %132, %133 : vector<8x64xf32>
    %135 = math.tanh %134 : vector<8x64xf32>
    %136 = arith.mulf %131, %135 : vector<8x64xf32>
    %cst_18 = arith.constant dense<0.000000e+00> : vector<8x256xf32>
    %137 = tpu.matmul %136, %0, %cst_18 {dimension_numbers = #tpu.dot_dimension_numbers<[1], [0], [0], [1], [0, 0, 1, 1], [], []>} : vector<8x64xf32>, vector<64x256xf32>, vector<8x256xf32> -> vector<8x256xf32>
    %138 = vector.extract_strided_slice %6 {offsets = [56, 0], sizes = [8, 256], strides = [1, 1]} : vector<72x256xf32> to vector<8x256xf32>
    %139 = arith.addf %137, %138 : vector<8x256xf32>
    %140 = arith.mulf %139, %15 : vector<8x256xf32>
    %141 = math.tanh %140 : vector<8x256xf32>
    %142 = arith.mulf %141, %15 : vector<8x256xf32>
    %143 = arith.addf %142, %18 : vector<8x256xf32>
    %144 = vector.extract_strided_slice %143 {offsets = [0, 0], sizes = [8, 64], strides = [1, 1]} : vector<8x256xf32> to vector<8x64xf32>
    %145 = vector.extract_strided_slice %143 {offsets = [0, 64], sizes = [8, 64], strides = [1, 1]} : vector<8x256xf32> to vector<8x64xf32>
    %146 = vector.extract_strided_slice %143 {offsets = [0, 128], sizes = [8, 64], strides = [1, 1]} : vector<8x256xf32> to vector<8x64xf32>
    %147 = vector.extract_strided_slice %143 {offsets = [0, 192], sizes = [8, 64], strides = [1, 1]} : vector<8x256xf32> to vector<8x64xf32>
    %148 = arith.mulf %145, %134 : vector<8x64xf32>
    %149 = arith.mulf %144, %146 : vector<8x64xf32>
    %150 = arith.addf %148, %149 : vector<8x64xf32>
    %151 = math.tanh %150 : vector<8x64xf32>
    %152 = arith.mulf %147, %151 : vector<8x64xf32>
    %cst_19 = arith.constant dense<0.000000e+00> : vector<8x256xf32>
    %153 = tpu.matmul %152, %0, %cst_19 {dimension_numbers = #tpu.dot_dimension_numbers<[1], [0], [0], [1], [0, 0, 1, 1], [], []>} : vector<8x64xf32>, vector<64x256xf32>, vector<8x256xf32> -> vector<8x256xf32>
    %154 = vector.extract_strided_slice %6 {offsets = [64, 0], sizes = [8, 256], strides = [1, 1]} : vector<72x256xf32> to vector<8x256xf32>
    %155 = arith.addf %153, %154 : vector<8x256xf32>
    %156 = arith.mulf %155, %15 : vector<8x256xf32>
    %157 = math.tanh %156 : vector<8x256xf32>
    %158 = arith.mulf %157, %15 : vector<8x256xf32>
    %159 = arith.addf %158, %18 : vector<8x256xf32>
    %160 = vector.extract_strided_slice %159 {offsets = [0, 0], sizes = [8, 64], strides = [1, 1]} : vector<8x256xf32> to vector<8x64xf32>
    %161 = vector.extract_strided_slice %159 {offsets = [0, 64], sizes = [8, 64], strides = [1, 1]} : vector<8x256xf32> to vector<8x64xf32>
    %162 = vector.extract_strided_slice %159 {offsets = [0, 128], sizes = [8, 64], strides = [1, 1]} : vector<8x256xf32> to vector<8x64xf32>
    %163 = vector.extract_strided_slice %159 {offsets = [0, 192], sizes = [8, 64], strides = [1, 1]} : vector<8x256xf32> to vector<8x64xf32>
    %164 = arith.mulf %161, %150 : vector<8x64xf32>
    %165 = arith.mulf %160, %162 : vector<8x64xf32>
    %166 = arith.addf %164, %165 : vector<8x64xf32>
    %167 = math.tanh %166 : vector<8x64xf32>
    %168 = arith.mulf %163, %167 : vector<8x64xf32>
    %169 = vector.extract_strided_slice %168 {offsets = [0, 32], sizes = [8, 32], strides = [1, 1]} : vector<8x64xf32> to vector<8x32xf32>
    %c0_20 = arith.constant 0 : index
    %c0_21 = arith.constant 0 : index
    %170 = vector.load %arg4[%c0_20, %c0_21] : memref<32x1xf32, #tpu.memory_space<vmem>>, vector<32x1xf32>
    %cst_22 = arith.constant dense<0.000000e+00> : vector<8x1xf32>
    %171 = tpu.matmul %169, %170, %cst_22 {dimension_numbers = #tpu.dot_dimension_numbers<[1], [0], [0], [1], [0, 0, 1, 1], [], []>} : vector<8x32xf32>, vector<32x1xf32>, vector<8x1xf32> -> vector<8x1xf32>
    %c0_23 = arith.constant 0 : index
    %c0_24 = arith.constant 0 : index
    %172 = vector.load %arg5[%c0_23, %c0_24] : memref<1x1xf32, #tpu.memory_space<vmem>>, vector<1x1xf32>
    %173 = vector.broadcast %172 : vector<1x1xf32> to vector<8x1xf32>
    %174 = arith.addf %171, %173 : vector<8x1xf32>
    %c0_25 = arith.constant 0 : index
    %c0_26 = arith.constant 0 : index
    %175 = vector.load %arg6[%c0_25, %c0_26] : memref<8x1xf32, #tpu.memory_space<vmem>>, vector<8x1xf32>
    tpu.vector_store %arg6[%c0_25, %c0_26], %174 {strides = array<i32>} : memref<8x1xf32, #tpu.memory_space<vmem>>, vector<8x1xf32>,
    return
  }
}

</mosaic_0001>

<llo_original>
// kernel: lstm_forward.1
$region0: #{lstm_forward.1}
  #allocation0 [shape = 'u32[]', space=smem, size = 0x4, offset = 0x4, fixed_abs, tag = 'smem constant byte address 0x4 - core index']
  #allocation1 [shape = 'u32[72,128]{1,0:T(1,128)}', space=vmem, size = 0x9000, scoped, tag = 'internal scratch']
  #allocation2 [shape = 'f32[1,1]{1,0:T(1,128)S(1)}', space=vmem, size = 0x200, scoped, tag = 'scoped memory for lstm_forward.1']
  %s0 = inlined_call_operand.vmem [shape: f32[72,3], index: 0, kind: input, shape index: {}]
  %s1 = inlined_call_operand.vmem [shape: f32[3,256], index: 1, kind: input, shape index: {}]
  %s2 = inlined_call_operand.vmem [shape: f32[1,256], index: 2, kind: input, shape index: {}]
  %s3 = inlined_call_operand.vmem [shape: f32[64,256], index: 3, kind: input, shape index: {}]
  %s4 = inlined_call_operand.vmem [shape: f32[32,1], index: 4, kind: input, shape index: {}]
  %s5 = inlined_call_operand.<no memory space> [shape: f32[1,1], index: 5, kind: input, shape index: {}]
  %s6 = inlined_call_operand.vmem [shape: f32[8,1], index: 6, kind: output, shape index: {}]
  %s7 = sld [smem:[#allocation0]]
  $region34: #{lstm_forward.1} parent=0
    _
  %s9 = ssub.s32 1, %s7
  %s10 = scalar_select 0, %s9, %s7
  %v11 = vstv %s5
  %12 = vst [vmem:[#allocation2] sm:$0x1] %v11
  // Predicated region
  $region2: #{lstm_forward.1} parent=0 // pred_check
    _
  $region3: #{lstm_forward.1} parent=0 // pred_check_branch
    %14 = sbr.rel (0) target = $region5
  $region4: #{lstm_forward.1} parent=0 // pred_region
    _
  $region5: #{lstm_forward.1} parent=0 // pred_fallthru
    _
  // Predicated region
  $region6: #{lstm_forward.1} parent=0 // pred_check
    _
  $region7: #{lstm_forward.1} parent=0 // pred_check_branch
    %16 = sbr.rel (0) target = $region9
  $region8: #{lstm_forward.1} parent=0 // pred_region
    _
  $region9: #{lstm_forward.1} parent=0 // pred_fallthru
    _
  // Predicated region
  $region10: #{lstm_forward.1} parent=0 // pred_check
    _
  $region11: #{lstm_forward.1} parent=0 // pred_check_branch
    %18 = sbr.rel (0) target = $region13
  $region12: #{lstm_forward.1} parent=0 // pred_region
    _
  $region13: #{lstm_forward.1} parent=0 // pred_fallthru
    _
  // Predicated region
  $region14: #{lstm_forward.1} parent=0 // pred_check
    _
  $region15: #{lstm_forward.1} parent=0 // pred_check_branch
    %20 = sbr.rel (0) target = $region17
  $region16: #{lstm_forward.1} parent=0 // pred_region
    _
  $region17: #{lstm_forward.1} parent=0 // pred_fallthru
    _
  // Predicated region
  $region18: #{lstm_forward.1} parent=0 // pred_check
    _
  $region19: #{lstm_forward.1} parent=0 // pred_check_branch
    %22 = sbr.rel (0) target = $region21
  $region20: #{lstm_forward.1} parent=0 // pred_region
    _
  $region21: #{lstm_forward.1} parent=0 // pred_fallthru
    _
  // Predicated region
  $region22: #{lstm_forward.1} parent=0 // pred_check
    _
  $region23: #{lstm_forward.1} parent=0 // pred_check_branch
    %24 = sbr.rel (0) target = $region25
  $region24: #{lstm_forward.1} parent=0 // pred_region
    _
  $region25: #{lstm_forward.1} parent=0 // pred_fallthru
    _
  %v25 = vld [vmem:[%s3] sm:$0xff]
  %v26 = vld [vmem:[%s3 + $0x8] sm:$0xff]
  %v27 = vld [vmem:[%s3 + $0x10] sm:$0xff]
  %v28 = vld [vmem:[%s3 + $0x18] sm:$0xff]
  %v29 = vld [vmem:[%s3 + $0x20] sm:$0xff]
  %v30 = vld [vmem:[%s3 + $0x28] sm:$0xff]
  %v31 = vld [vmem:[%s3 + $0x30] sm:$0xff]
  %v32 = vld [vmem:[%s3 + $0x38] sm:$0xff]
  %v33 = vld [vmem:[%s3 + $0x40] sm:$0xff]
  %v34 = vld [vmem:[%s3 + $0x48] sm:$0xff]
  %v35 = vld [vmem:[%s3 + $0x50] sm:$0xff]
  %v36 = vld [vmem:[%s3 + $0x58] sm:$0xff]
  %v37 = vld [vmem:[%s3 + $0x60] sm:$0xff]
  %v38 = vld [vmem:[%s3 + $0x68] sm:$0xff]
  %v39 = vld [vmem:[%s3 + $0x70] sm:$0xff]
  %v40 = vld [vmem:[%s3 + $0x78] sm:$0xff]
  %v41 = vld [vmem:[%s0] sm:$0xff]
  %v42 = vld [vmem:[%s0 + $0x8] sm:$0xff]
  %v43 = vld [vmem:[%s0 + $0x10] sm:$0xff]
  %v44 = vld [vmem:[%s0 + $0x18] sm:$0xff]
  %v45 = vld [vmem:[%s0 + $0x20] sm:$0xff]
  %v46 = vld [vmem:[%s0 + $0x28] sm:$0xff]
  %v47 = vld [vmem:[%s0 + $0x30] sm:$0xff]
  %v48 = vld [vmem:[%s0 + $0x38] sm:$0xff]
  %v49 = vld [vmem:[%s0 + $0x40] sm:$0xff]
  %v50 = vld [vmem:[%s1] sm:$0x77]
  %v51 = vld [vmem:[%s2] sm:$0x3]
  %v53 = vperm.slane %v51, 0
  %v54 = vperm.slane %v51, 1
  %58 = vst [vmem:[#allocation1] ss:$2 sm:$0xff] %v50
  %v59 = vld.sshfl [vmem:[#allocation1] sm:$0xff pattern:$0x75316420]
  %v60 = vld.sshfl [vmem:[#allocation1 + $0x8] sm:$0xff pattern:$0x75316420]
  %vm61 = vcmask 23552
  %v63 = vsel %vm61, %v41, 0
  %v66 = vsel %vm61, %v42, 0
  %v69 = vsel %vm61, %v43, 0
  %v72 = vsel %vm61, %v44, 0
  %v75 = vsel %vm61, %v45, 0
  %v78 = vsel %vm61, %v46, 0
  %v81 = vsel %vm61, %v47, 0
  %v84 = vsel %vm61, %v48, 0
  %v87 = vsel %vm61, %v49, 0
  %vm89 = vcmask 1042432
  %v90 = vsel %vm89, %v59, 0
  %v92 = vsel %vm89, %v60, 0
  %94 = vmatpush.msra.mxu0 0.0
  %95 = vmatpush.msra.mxu0 0.0
  %96 = vmatpush.msra.mxu0 0.0
  %97 = vmatpush.msra.mxu0 0.0
  %98 = vmatpush.msra.mxu0 0.0
  %99 = vmatpush.msra.mxu0 0.0
  %100 = vmatpush.msra.mxu0 0.0
  %101 = vmatpush.msra.mxu0 0.0
  %102 = vmatpush.msra.mxu0 0.0
  %103 = vmatpush.msra.mxu0 0.0
  %104 = vmatpush.msra.mxu0 0.0
  %105 = vmatpush.msra.mxu0 0.0
  %106 = vmatpush.msra.mxu0 0.0
  %107 = vmatpush.msra.mxu0 0.0
  %108 = vmatpush.msra.mxu0 0.0
  %109 = vmatpush.msra.mxu0 %v90
  %110 = vmatmul.f32.gmra.mxu0 %v63
  %v111 = vpop.f32.mrf.mxu0
  %v112 = vadd.f32 %v53, %v111
  %113 = vmatmul.f32.gmra.mxu0 %v66
  %v114 = vpop.f32.mrf.mxu0
  %v115 = vadd.f32 %v53, %v114
  %116 = vmatmul.f32.gmra.mxu0 %v69
  %v117 = vpop.f32.mrf.mxu0
  %v118 = vadd.f32 %v53, %v117
  %119 = vmatmul.f32.gmra.mxu0 %v72
  %v120 = vpop.f32.mrf.mxu0
  %v121 = vadd.f32 %v53, %v120
  %122 = vmatmul.f32.gmra.mxu0 %v75
  %v123 = vpop.f32.mrf.mxu0
  %v124 = vadd.f32 %v53, %v123
  %125 = vmatmul.f32.gmra.mxu0 %v78
  %v126 = vpop.f32.mrf.mxu0
  %v127 = vadd.f32 %v53, %v126
  %128 = vmatmul.f32.gmra.mxu0 %v81
  %v129 = vpop.f32.mrf.mxu0
  %v130 = vadd.f32 %v53, %v129
  %131 = vmatmul.f32.gmra.mxu0 %v84
  %v132 = vpop.f32.mrf.mxu0
  %v133 = vadd.f32 %v53, %v132
  %134 = vmatmul.f32.gmra.mxu0 %v87
  %v135 = vpop.f32.mrf.mxu0
  %v136 = vadd.f32 %v53, %v135
  %137 = vdwg.mxu0
  %138 = vmatpush.msra.mxu0 0.0
  %139 = vmatpush.msra.mxu0 0.0
  %140 = vmatpush.msra.mxu0 0.0
  %141 = vmatpush.msra.mxu0 0.0
  %142 = vmatpush.msra.mxu0 0.0
  %143 = vmatpush.msra.mxu0 0.0
  %144 = vmatpush.msra.mxu0 0.0
  %145 = vmatpush.msra.mxu0 0.0
  %146 = vmatpush.msra.mxu0 0.0
  %147 = vmatpush.msra.mxu0 0.0
  %148 = vmatpush.msra.mxu0 0.0
  %149 = vmatpush.msra.mxu0 0.0
  %150 = vmatpush.msra.mxu0 0.0
  %151 = vmatpush.msra.mxu0 0.0
  %152 = vmatpush.msra.mxu0 0.0
  %153 = vmatpush.msra.mxu0 %v92
  %154 = vmatmul.f32.gmra.mxu0 %v63
  %v155 = vpop.f32.mrf.mxu0
  %v156 = vadd.f32 %v54, %v155
  %157 = vmatmul.f32.gmra.mxu0 %v66
  %v158 = vpop.f32.mrf.mxu0
  %v159 = vadd.f32 %v54, %v158
  %160 = vmatmul.f32.gmra.mxu0 %v69
  %v161 = vpop.f32.mrf.mxu0
  %v162 = vadd.f32 %v54, %v161
  %163 = vmatmul.f32.gmra.mxu0 %v72
  %v164 = vpop.f32.mrf.mxu0
  %v165 = vadd.f32 %v54, %v164
  %166 = vmatmul.f32.gmra.mxu0 %v75
  %v167 = vpop.f32.mrf.mxu0
  %v168 = vadd.f32 %v54, %v167
  %169 = vmatmul.f32.gmra.mxu0 %v78
  %v170 = vpop.f32.mrf.mxu0
  %v171 = vadd.f32 %v54, %v170
  %172 = vmatmul.f32.gmra.mxu0 %v81
  %v173 = vpop.f32.mrf.mxu0
  %v174 = vadd.f32 %v54, %v173
  %175 = vmatmul.f32.gmra.mxu0 %v84
  %v176 = vpop.f32.mrf.mxu0
  %v177 = vadd.f32 %v54, %v176
  %178 = vmatmul.f32.gmra.mxu0 %v87
  %v179 = vpop.f32.mrf.mxu0
  %v180 = vadd.f32 %v54, %v179
  %181 = vdwg.mxu0
  %v182 = vlaneseq
  %v183 = vand.u32 %v182, 127
  %v184 = vadd.s32 %v183, 128
  %vm185 = vcmp.ge.s32.totalorder %v183, 128
  %vm186 = vcmp.ge.s32.totalorder %v184, 128
  %vm187 = vcmp.lt.s32.totalorder %v183, 192
  %vm188 = vcmp.lt.s32.totalorder %v184, 192
  %vm189 = vmand %vm185, %vm187
  %vm190 = vmand %vm186, %vm188
  %v191 = vsel %vm189, 1.0, 0.5
  %v192 = vsel %vm190, 1.0, 0.5
  %v193 = vsel %vm189, 0.0, 0.5
  %v194 = vsel %vm190, 0.0, 0.5
  %vm195 = vcmp.lt.s32.totalorder %v183, 32
  %v196 = vsel %vm195, 1, 0
  %v197 = vcvt.s32.f32 %v196
  %v198 = vmul.f32 %v112, %v191
  %v199 = vmul.f32 %v156, %v192
  %v200 = vtanh.pop %v198
  %v201 = vtanh.pop %v199
  %v202 = vmul.f32 %v200, %v191
  %v203 = vmul.f32 %v201, %v192
  %v204 = vadd.f32 %v202, %v193
  %v205 = vadd.f32 %v203, %v194
  %v206 = vmul.f32 %v204, 0.0
  %v207 = vmul.f32 %v204, %v205
  %209 = vrot.lane.b32.xlu0 %v207, 64
  %v210 = vpop.permute.xlu0 %209
  %v212 = vadd.f32 %v206, %v210
  %v213 = vtanh.pop %v212
  %v214 = vmul.f32 %v205, %v213
  %216 = vrot.lane.b32.xlu0 %v197, 64
  %v217 = vpop.permute.xlu0 %216
  %v219 = vmul.f32 %v214, %v217
  %v220 = vmul.f32 %v212, %v217
  %222 = vrot.lane.b32.xlu0 %v219, 64
  %v223 = vpop.permute.xlu0 %222
  %vm224 = vcmask 523264
  %v225 = vsel %vm224, %v223, 0
  %227 = vmatpush.msra.mxu0 0.0
  %228 = vmatpush.msra.mxu0 0.0
  %229 = vmatpush.msra.mxu0 0.0
  %230 = vmatpush.msra.mxu0 0.0
  %231 = vmatpush.msra.mxu0 0.0
  %232 = vmatpush.msra.mxu0 0.0
  %233 = vmatpush.msra.mxu0 0.0
  %234 = vmatpush.msra.mxu0 0.0
  %235 = vmatpush.msra.mxu0 %v39
  %236 = vmatpush.msra.mxu0 %v37
  %237 = vmatpush.msra.mxu0 %v35
  %238 = vmatpush.msra.mxu0 %v33
  %239 = vmatpush.msra.mxu0 %v31
  %240 = vmatpush.msra.mxu0 %v29
  %241 = vmatpush.msra.mxu0 %v27
  %242 = vmatpush.msra.mxu0 %v25
  %243 = vmatmul.f32.gmra.mxu0 %v225
  %v244 = vpop.f32.mrf.mxu0
  %v245 = vadd.f32 %v115, %v244
  %246 = vdwg.mxu0
  %247 = vmatpush.msra.mxu0 0.0
  %248 = vmatpush.msra.mxu0 0.0
  %249 = vmatpush.msra.mxu0 0.0
  %250 = vmatpush.msra.mxu0 0.0
  %251 = vmatpush.msra.mxu0 0.0
  %252 = vmatpush.msra.mxu0 0.0
  %253 = vmatpush.msra.mxu0 0.0
  %254 = vmatpush.msra.mxu0 0.0
  %255 = vmatpush.msra.mxu0 %v40
  %256 = vmatpush.msra.mxu0 %v38
  %257 = vmatpush.msra.mxu0 %v36
  %258 = vmatpush.msra.mxu0 %v34
  %259 = vmatpush.msra.mxu0 %v32
  %260 = vmatpush.msra.mxu0 %v30
  %261 = vmatpush.msra.mxu0 %v28
  %262 = vmatpush.msra.mxu0 %v26
  %263 = vmatmul.f32.gmra.mxu0 %v225
  %v264 = vpop.f32.mrf.mxu0
  %v265 = vadd.f32 %v159, %v264
  %266 = vdwg.mxu0
  %v267 = vmul.f32 %v245, %v191
  %v268 = vmul.f32 %v265, %v192
  %v269 = vtanh.pop %v267
  %v270 = vtanh.pop %v268
  %v271 = vmul.f32 %v269, %v191
  %v272 = vmul.f32 %v270, %v192
  %v273 = vadd.f32 %v271, %v193
  %v274 = vadd.f32 %v272, %v194
  %v275 = vmul.f32 %v273, %v220
  %v276 = vmul.f32 %v273, %v274
  %278 = vrot.lane.b32.xlu0 %v276, 64
  %v279 = vpop.permute.xlu0 %278
  %v281 = vadd.f32 %v275, %v279
  %v282 = vtanh.pop %v281
  %v283 = vmul.f32 %v274, %v282
  %285 = vrot.lane.b32.xlu0 %v283, 64
  %v286 = vpop.permute.xlu0 %285
  %v287 = vsel %vm224, %v286, 0
  %289 = vmatpush.msra.mxu0 0.0
  %290 = vmatpush.msra.mxu0 0.0
  %291 = vmatpush.msra.mxu0 0.0
  %292 = vmatpush.msra.mxu0 0.0
  %293 = vmatpush.msra.mxu0 0.0
  %294 = vmatpush.msra.mxu0 0.0
  %295 = vmatpush.msra.mxu0 0.0
  %296 = vmatpush.msra.mxu0 0.0
  %297 = vmatpush.msra.mxu0 %v39
  %298 = vmatpush.msra.mxu0 %v37
  %299 = vmatpush.msra.mxu0 %v35
  %300 = vmatpush.msra.mxu0 %v33
  %301 = vmatpush.msra.mxu0 %v31
  %302 = vmatpush.msra.mxu0 %v29
  %303 = vmatpush.msra.mxu0 %v27
  %304 = vmatpush.msra.mxu0 %v25
  %305 = vmatmul.f32.gmra.mxu0 %v287
  %v306 = vpop.f32.mrf.mxu0
  %v307 = vadd.f32 %v118, %v306
  %308 = vdwg.mxu0
  %309 = vmatpush.msra.mxu0 0.0
  %310 = vmatpush.msra.mxu0 0.0
  %311 = vmatpush.msra.mxu0 0.0
  %312 = vmatpush.msra.mxu0 0.0
  %313 = vmatpush.msra.mxu0 0.0
  %314 = vmatpush.msra.mxu0 0.0
  %315 = vmatpush.msra.mxu0 0.0
  %316 = vmatpush.msra.mxu0 0.0
  %317 = vmatpush.msra.mxu0 %v40
  %318 = vmatpush.msra.mxu0 %v38
  %319 = vmatpush.msra.mxu0 %v36
  %320 = vmatpush.msra.mxu0 %v34
  %321 = vmatpush.msra.mxu0 %v32
  %322 = vmatpush.msra.mxu0 %v30
  %323 = vmatpush.msra.mxu0 %v28
  %324 = vmatpush.msra.mxu0 %v26
  %325 = vmatmul.f32.gmra.mxu0 %v287
  %v326 = vpop.f32.mrf.mxu0
  %v327 = vadd.f32 %v162, %v326
  %328 = vdwg.mxu0
  %v329 = vmul.f32 %v307, %v191
  %v330 = vmul.f32 %v327, %v192
  %v331 = vtanh.pop %v329
  %v332 = vtanh.pop %v330
  %v333 = vmul.f32 %v331, %v191
  %v334 = vmul.f32 %v332, %v192
  %v335 = vadd.f32 %v333, %v193
  %v336 = vadd.f32 %v334, %v194
  %v337 = vmul.f32 %v335, %v281
  %v338 = vmul.f32 %v335, %v336
  %340 = vrot.lane.b32.xlu0 %v338, 64
  %v341 = vpop.permute.xlu0 %340
  %v343 = vadd.f32 %v337, %v341
  %v344 = vtanh.pop %v343
  %v345 = vmul.f32 %v336, %v344
  %347 = vrot.lane.b32.xlu0 %v345, 64
  %v348 = vpop.permute.xlu0 %347
  %v349 = vsel %vm224, %v348, 0
  %351 = vmatpush.msra.mxu0 0.0
  %352 = vmatpush.msra.mxu0 0.0
  %353 = vmatpush.msra.mxu0 0.0
  %354 = vmatpush.msra.mxu0 0.0
  %355 = vmatpush.msra.mxu0 0.0
  %356 = vmatpush.msra.mxu0 0.0
  %357 = vmatpush.msra.mxu0 0.0
  %358 = vmatpush.msra.mxu0 0.0
  %359 = vmatpush.msra.mxu0 %v39
  %360 = vmatpush.msra.mxu0 %v37
  %361 = vmatpush.msra.mxu0 %v35
  %362 = vmatpush.msra.mxu0 %v33
  %363 = vmatpush.msra.mxu0 %v31
  %364 = vmatpush.msra.mxu0 %v29
  %365 = vmatpush.msra.mxu0 %v27
  %366 = vmatpush.msra.mxu0 %v25
  %367 = vmatmul.f32.gmra.mxu0 %v349
  %v368 = vpop.f32.mrf.mxu0
  %v369 = vadd.f32 %v121, %v368
  %370 = vdwg.mxu0
  %371 = vmatpush.msra.mxu0 0.0
  %372 = vmatpush.msra.mxu0 0.0
  %373 = vmatpush.msra.mxu0 0.0
  %374 = vmatpush.msra.mxu0 0.0
  %375 = vmatpush.msra.mxu0 0.0
  %376 = vmatpush.msra.mxu0 0.0
  %377 = vmatpush.msra.mxu0 0.0
  %378 = vmatpush.msra.mxu0 0.0
  %379 = vmatpush.msra.mxu0 %v40
  %380 = vmatpush.msra.mxu0 %v38
  %381 = vmatpush.msra.mxu0 %v36
  %382 = vmatpush.msra.mxu0 %v34
  %383 = vmatpush.msra.mxu0 %v32
  %384 = vmatpush.msra.mxu0 %v30
  %385 = vmatpush.msra.mxu0 %v28
  %386 = vmatpush.msra.mxu0 %v26
  %387 = vmatmul.f32.gmra.mxu0 %v349
  %v388 = vpop.f32.mrf.mxu0
  %v389 = vadd.f32 %v165, %v388
  %390 = vdwg.mxu0
  %v391 = vmul.f32 %v369, %v191
  %v392 = vmul.f32 %v389, %v192
  %v393 = vtanh.pop %v391
  %v394 = vtanh.pop %v392
  %v395 = vmul.f32 %v393, %v191
  %v396 = vmul.f32 %v394, %v192
  %v397 = vadd.f32 %v395, %v193
  %v398 = vadd.f32 %v396, %v194
  %v399 = vmul.f32 %v397, %v343
  %v400 = vmul.f32 %v397, %v398
  %402 = vrot.lane.b32.xlu0 %v400, 64
  %v403 = vpop.permute.xlu0 %402
  %v405 = vadd.f32 %v399, %v403
  %v406 = vtanh.pop %v405
  %v407 = vmul.f32 %v398, %v406
  %409 = vrot.lane.b32.xlu0 %v407, 64
  %v410 = vpop.permute.xlu0 %409
  %v411 = vsel %vm224, %v410, 0
  %413 = vmatpush.msra.mxu0 0.0
  %414 = vmatpush.msra.mxu0 0.0
  %415 = vmatpush.msra.mxu0 0.0
  %416 = vmatpush.msra.mxu0 0.0
  %417 = vmatpush.msra.mxu0 0.0
  %418 = vmatpush.msra.mxu0 0.0
  %419 = vmatpush.msra.mxu0 0.0
  %420 = vmatpush.msra.mxu0 0.0
  %421 = vmatpush.msra.mxu0 %v39
  %422 = vmatpush.msra.mxu0 %v37
  %423 = vmatpush.msra.mxu0 %v35
  %424 = vmatpush.msra.mxu0 %v33
  %425 = vmatpush.msra.mxu0 %v31
  %426 = vmatpush.msra.mxu0 %v29
  %427 = vmatpush.msra.mxu0 %v27
  %428 = vmatpush.msra.mxu0 %v25
  %429 = vmatmul.f32.gmra.mxu0 %v411
  %v430 = vpop.f32.mrf.mxu0
  %v431 = vadd.f32 %v124, %v430
  %432 = vdwg.mxu0
  %433 = vmatpush.msra.mxu0 0.0
  %434 = vmatpush.msra.mxu0 0.0
  %435 = vmatpush.msra.mxu0 0.0
  %436 = vmatpush.msra.mxu0 0.0
  %437 = vmatpush.msra.mxu0 0.0
  %438 = vmatpush.msra.mxu0 0.0
  %439 = vmatpush.msra.mxu0 0.0
  %440 = vmatpush.msra.mxu0 0.0
  %441 = vmatpush.msra.mxu0 %v40
  %442 = vmatpush.msra.mxu0 %v38
  %443 = vmatpush.msra.mxu0 %v36
  %444 = vmatpush.msra.mxu0 %v34
  %445 = vmatpush.msra.mxu0 %v32
  %446 = vmatpush.msra.mxu0 %v30
  %447 = vmatpush.msra.mxu0 %v28
  %448 = vmatpush.msra.mxu0 %v26
  %449 = vmatmul.f32.gmra.mxu0 %v411
  %v450 = vpop.f32.mrf.mxu0
  %v451 = vadd.f32 %v168, %v450
  %452 = vdwg.mxu0
  %v453 = vmul.f32 %v431, %v191
  %v454 = vmul.f32 %v451, %v192
  %v455 = vtanh.pop %v453
  %v456 = vtanh.pop %v454
  %v457 = vmul.f32 %v455, %v191
  %v458 = vmul.f32 %v456, %v192
  %v459 = vadd.f32 %v457, %v193
  %v460 = vadd.f32 %v458, %v194
  %v461 = vmul.f32 %v459, %v405
  %v462 = vmul.f32 %v459, %v460
  %464 = vrot.lane.b32.xlu0 %v462, 64
  %v465 = vpop.permute.xlu0 %464
  %v467 = vadd.f32 %v461, %v465
  %v468 = vtanh.pop %v467
  %v469 = vmul.f32 %v460, %v468
  %471 = vrot.lane.b32.xlu0 %v469, 64
  %v472 = vpop.permute.xlu0 %471
  %v473 = vsel %vm224, %v472, 0
  %475 = vmatpush.msra.mxu0 0.0
  %476 = vmatpush.msra.mxu0 0.0
  %477 = vmatpush.msra.mxu0 0.0
  %478 = vmatpush.msra.mxu0 0.0
  %479 = vmatpush.msra.mxu0 0.0
  %480 = vmatpush.msra.mxu0 0.0
  %481 = vmatpush.msra.mxu0 0.0
  %482 = vmatpush.msra.mxu0 0.0
  %483 = vmatpush.msra.mxu0 %v39
  %484 = vmatpush.msra.mxu0 %v37
  %485 = vmatpush.msra.mxu0 %v35
  %486 = vmatpush.msra.mxu0 %v33
  %487 = vmatpush.msra.mxu0 %v31
  %488 = vmatpush.msra.mxu0 %v29
  %489 = vmatpush.msra.mxu0 %v27
  %490 = vmatpush.msra.mxu0 %v25
  %491 = vmatmul.f32.gmra.mxu0 %v473
  %v492 = vpop.f32.mrf.mxu0
  %v493 = vadd.f32 %v127, %v492
  %494 = vdwg.mxu0
  %495 = vmatpush.msra.mxu0 0.0
  %496 = vmatpush.msra.mxu0 0.0
  %497 = vmatpush.msra.mxu0 0.0
  %498 = vmatpush.msra.mxu0 0.0
  %499 = vmatpush.msra.mxu0 0.0
  %500 = vmatpush.msra.mxu0 0.0
  %501 = vmatpush.msra.mxu0 0.0
  %502 = vmatpush.msra.mxu0 0.0
  %503 = vmatpush.msra.mxu0 %v40
  %504 = vmatpush.msra.mxu0 %v38
  %505 = vmatpush.msra.mxu0 %v36
  %506 = vmatpush.msra.mxu0 %v34
  %507 = vmatpush.msra.mxu0 %v32
  %508 = vmatpush.msra.mxu0 %v30
  %509 = vmatpush.msra.mxu0 %v28
  %510 = vmatpush.msra.mxu0 %v26
  %511 = vmatmul.f32.gmra.mxu0 %v473
  %v512 = vpop.f32.mrf.mxu0
  %v513 = vadd.f32 %v171, %v512
  %514 = vdwg.mxu0
  %v515 = vmul.f32 %v493, %v191
  %v516 = vmul.f32 %v513, %v192
  %v517 = vtanh.pop %v515
  %v518 = vtanh.pop %v516
  %v519 = vmul.f32 %v517, %v191
  %v520 = vmul.f32 %v518, %v192
  %v521 = vadd.f32 %v519, %v193
  %v522 = vadd.f32 %v520, %v194
  %v523 = vmul.f32 %v521, %v467
  %v524 = vmul.f32 %v521, %v522
  %526 = vrot.lane.b32.xlu0 %v524, 64
  %v527 = vpop.permute.xlu0 %526
  %v529 = vadd.f32 %v523, %v527
  %v530 = vtanh.pop %v529
  %v531 = vmul.f32 %v522, %v530
  %533 = vrot.lane.b32.xlu0 %v531, 64
  %v534 = vpop.permute.xlu0 %533
  %v535 = vsel %vm224, %v534, 0
  %537 = vmatpush.msra.mxu0 0.0
  %538 = vmatpush.msra.mxu0 0.0
  %539 = vmatpush.msra.mxu0 0.0
  %540 = vmatpush.msra.mxu0 0.0
  %541 = vmatpush.msra.mxu0 0.0
  %542 = vmatpush.msra.mxu0 0.0
  %543 = vmatpush.msra.mxu0 0.0
  %544 = vmatpush.msra.mxu0 0.0
  %545 = vmatpush.msra.mxu0 %v39
  %546 = vmatpush.msra.mxu0 %v37
  %547 = vmatpush.msra.mxu0 %v35
  %548 = vmatpush.msra.mxu0 %v33
  %549 = vmatpush.msra.mxu0 %v31
  %550 = vmatpush.msra.mxu0 %v29
  %551 = vmatpush.msra.mxu0 %v27
  %552 = vmatpush.msra.mxu0 %v25
  %553 = vmatmul.f32.gmra.mxu0 %v535
  %v554 = vpop.f32.mrf.mxu0
  %v555 = vadd.f32 %v130, %v554
  %556 = vdwg.mxu0
  %557 = vmatpush.msra.mxu0 0.0
  %558 = vmatpush.msra.mxu0 0.0
  %559 = vmatpush.msra.mxu0 0.0
  %560 = vmatpush.msra.mxu0 0.0
  %561 = vmatpush.msra.mxu0 0.0
  %562 = vmatpush.msra.mxu0 0.0
  %563 = vmatpush.msra.mxu0 0.0
  %564 = vmatpush.msra.mxu0 0.0
  %565 = vmatpush.msra.mxu0 %v40
  %566 = vmatpush.msra.mxu0 %v38
  %567 = vmatpush.msra.mxu0 %v36
  %568 = vmatpush.msra.mxu0 %v34
  %569 = vmatpush.msra.mxu0 %v32
  %570 = vmatpush.msra.mxu0 %v30
  %571 = vmatpush.msra.mxu0 %v28
  %572 = vmatpush.msra.mxu0 %v26
  %573 = vmatmul.f32.gmra.mxu0 %v535
  %v574 = vpop.f32.mrf.mxu0
  %v575 = vadd.f32 %v174, %v574
  %576 = vdwg.mxu0
  %v577 = vmul.f32 %v555, %v191
  %v578 = vmul.f32 %v575, %v192
  %v579 = vtanh.pop %v577
  %v580 = vtanh.pop %v578
  %v581 = vmul.f32 %v579, %v191
  %v582 = vmul.f32 %v580, %v192
  %v583 = vadd.f32 %v581, %v193
  %v584 = vadd.f32 %v582, %v194
  %v585 = vmul.f32 %v583, %v529
  %v586 = vmul.f32 %v583, %v584
  %588 = vrot.lane.b32.xlu0 %v586, 64
  %v589 = vpop.permute.xlu0 %588
  %v591 = vadd.f32 %v585, %v589
  %v592 = vtanh.pop %v591
  %v593 = vmul.f32 %v584, %v592
  %595 = vrot.lane.b32.xlu0 %v593, 64
  %v596 = vpop.permute.xlu0 %595
  %v597 = vsel %vm224, %v596, 0
  %599 = vmatpush.msra.mxu0 0.0
  %600 = vmatpush.msra.mxu0 0.0
  %601 = vmatpush.msra.mxu0 0.0
  %602 = vmatpush.msra.mxu0 0.0
  %603 = vmatpush.msra.mxu0 0.0
  %604 = vmatpush.msra.mxu0 0.0
  %605 = vmatpush.msra.mxu0 0.0
  %606 = vmatpush.msra.mxu0 0.0
  %607 = vmatpush.msra.mxu0 %v39
  %608 = vmatpush.msra.mxu0 %v37
  %609 = vmatpush.msra.mxu0 %v35
  %610 = vmatpush.msra.mxu0 %v33
  %611 = vmatpush.msra.mxu0 %v31
  %612 = vmatpush.msra.mxu0 %v29
  %613 = vmatpush.msra.mxu0 %v27
  %614 = vmatpush.msra.mxu0 %v25
  %615 = vmatmul.f32.gmra.mxu0 %v597
  %v616 = vpop.f32.mrf.mxu0
  %v617 = vadd.f32 %v133, %v616
  %618 = vdwg.mxu0
  %619 = vmatpush.msra.mxu0 0.0
  %620 = vmatpush.msra.mxu0 0.0
  %621 = vmatpush.msra.mxu0 0.0
  %622 = vmatpush.msra.mxu0 0.0
  %623 = vmatpush.msra.mxu0 0.0
  %624 = vmatpush.msra.mxu0 0.0
  %625 = vmatpush.msra.mxu0 0.0
  %626 = vmatpush.msra.mxu0 0.0
  %627 = vmatpush.msra.mxu0 %v40
  %628 = vmatpush.msra.mxu0 %v38
  %629 = vmatpush.msra.mxu0 %v36
  %630 = vmatpush.msra.mxu0 %v34
  %631 = vmatpush.msra.mxu0 %v32
  %632 = vmatpush.msra.mxu0 %v30
  %633 = vmatpush.msra.mxu0 %v28
  %634 = vmatpush.msra.mxu0 %v26
  %635 = vmatmul.f32.gmra.mxu0 %v597
  %v636 = vpop.f32.mrf.mxu0
  %v637 = vadd.f32 %v177, %v636
  %638 = vdwg.mxu0
  %v639 = vmul.f32 %v617, %v191
  %v640 = vmul.f32 %v637, %v192
  %v641 = vtanh.pop %v639
  %v642 = vtanh.pop %v640
  %v643 = vmul.f32 %v641, %v191
  %v644 = vmul.f32 %v642, %v192
  %v645 = vadd.f32 %v643, %v193
  %v646 = vadd.f32 %v644, %v194
  %v647 = vmul.f32 %v645, %v591
  %v648 = vmul.f32 %v645, %v646
  %650 = vrot.lane.b32.xlu0 %v648, 64
  %v651 = vpop.permute.xlu0 %650
  %v653 = vadd.f32 %v647, %v651
  %v654 = vtanh.pop %v653
  %v655 = vmul.f32 %v646, %v654
  %657 = vrot.lane.b32.xlu0 %v655, 64
  %v658 = vpop.permute.xlu0 %657
  %v659 = vsel %vm224, %v658, 0
  %661 = vmatpush.msra.mxu0 0.0
  %662 = vmatpush.msra.mxu0 0.0
  %663 = vmatpush.msra.mxu0 0.0
  %664 = vmatpush.msra.mxu0 0.0
  %665 = vmatpush.msra.mxu0 0.0
  %666 = vmatpush.msra.mxu0 0.0
  %667 = vmatpush.msra.mxu0 0.0
  %668 = vmatpush.msra.mxu0 0.0
  %669 = vmatpush.msra.mxu0 %v39
  %670 = vmatpush.msra.mxu0 %v37
  %671 = vmatpush.msra.mxu0 %v35
  %672 = vmatpush.msra.mxu0 %v33
  %673 = vmatpush.msra.mxu0 %v31
  %674 = vmatpush.msra.mxu0 %v29
  %675 = vmatpush.msra.mxu0 %v27
  %676 = vmatpush.msra.mxu0 %v25
  %677 = vmatmul.f32.gmra.mxu0 %v659
  %v678 = vpop.f32.mrf.mxu0
  %v679 = vadd.f32 %v136, %v678
  %680 = vdwg.mxu0
  %681 = vmatpush.msra.mxu0 0.0
  %682 = vmatpush.msra.mxu0 0.0
  %683 = vmatpush.msra.mxu0 0.0
  %684 = vmatpush.msra.mxu0 0.0
  %685 = vmatpush.msra.mxu0 0.0
  %686 = vmatpush.msra.mxu0 0.0
  %687 = vmatpush.msra.mxu0 0.0
  %688 = vmatpush.msra.mxu0 0.0
  %689 = vmatpush.msra.mxu0 %v40
  %690 = vmatpush.msra.mxu0 %v38
  %691 = vmatpush.msra.mxu0 %v36
  %692 = vmatpush.msra.mxu0 %v34
  %693 = vmatpush.msra.mxu0 %v32
  %694 = vmatpush.msra.mxu0 %v30
  %695 = vmatpush.msra.mxu0 %v28
  %696 = vmatpush.msra.mxu0 %v26
  %697 = vmatmul.f32.gmra.mxu0 %v659
  %v698 = vpop.f32.mrf.mxu0
  %v699 = vadd.f32 %v180, %v698
  %700 = vdwg.mxu0
  %v701 = vmul.f32 %v679, %v191
  %v702 = vmul.f32 %v699, %v192
  %v703 = vtanh.pop %v701
  %v704 = vtanh.pop %v702
  %v705 = vmul.f32 %v703, %v191
  %v706 = vmul.f32 %v704, %v192
  %v707 = vadd.f32 %v705, %v193
  %v708 = vadd.f32 %v706, %v194
  %v709 = vmul.f32 %v707, %v653
  %v710 = vmul.f32 %v707, %v708
  %712 = vrot.lane.b32.xlu0 %v710, 64
  %v713 = vpop.permute.xlu0 %712
  %v715 = vadd.f32 %v709, %v713
  %v716 = vtanh.pop %v715
  %v717 = vmul.f32 %v708, %v716
  %v718 = vld [vmem:[%s4] sm:$0xff]
  %v719 = vld [vmem:[%s4 + $0x8] sm:$0xff]
  %v720 = vld [vmem:[%s4 + $0x10] sm:$0xff]
  %v721 = vld [vmem:[%s4 + $0x18] sm:$0xff]
  %v722 = vld [vmem:[#allocation2] sm:$0x1]
  %v724 = vperm.slane %v722, 0
  %727 = vrot.lane.b32.xlu0 %v717, 32
  %v728 = vpop.permute.xlu0 %727
  %vm729 = vcmask 261120
  %v730 = vsel %vm729, %v728, 0
  %732 = vmatpush.msra.mxu0 0.0
  %733 = vmatpush.msra.mxu0 0.0
  %734 = vmatpush.msra.mxu0 0.0
  %735 = vmatpush.msra.mxu0 0.0
  %736 = vmatpush.msra.mxu0 0.0
  %737 = vmatpush.msra.mxu0 0.0
  %738 = vmatpush.msra.mxu0 0.0
  %739 = vmatpush.msra.mxu0 0.0
  %740 = vmatpush.msra.mxu0 0.0
  %741 = vmatpush.msra.mxu0 0.0
  %742 = vmatpush.msra.mxu0 0.0
  %743 = vmatpush.msra.mxu0 0.0
  %744 = vmatpush.msra.mxu0 %v721
  %745 = vmatpush.msra.mxu0 %v720
  %746 = vmatpush.msra.mxu0 %v719
  %747 = vmatpush.msra.mxu0 %v718
  %748 = vmatmul.f32.gmra.mxu0 %v730
  %v749 = vpop.f32.mrf.mxu0
  %v750 = vadd.f32 %v724, %v749
  %751 = vdwg.mxu0
  %vm752 = vcmask 7168
  %753 = vst.msk [vmem:[%s6] sm:$0xff] %vm752, %v750
  // Predicated region
  $region26: #{lstm_forward.1} parent=0 // pred_check
    _
  $region27: #{lstm_forward.1} parent=0 // pred_check_branch
    %755 = sbr.rel (0) target = $region29
  $region28: #{lstm_forward.1} parent=0 // pred_region
    _
  $region29: #{lstm_forward.1} parent=0 // pred_fallthru
    _
  // Predicated region
  $region30: #{lstm_forward.1} parent=0 // pred_check
    _
  $region31: #{lstm_forward.1} parent=0 // pred_check_branch
    %757 = sbr.rel (0) target = $region33
  $region32: #{lstm_forward.1} parent=0 // pred_region
    _
  $region33: #{lstm_forward.1} parent=0 // pred_fallthru
    _

</llo_original>
